<compile_context>
chip_gen: v5e
topology: v5e:2x2
jax: 0.10.0
libtpu: 0.0.40
codegen_flags: <defaults>
</compile_context>

<pallas_src>
import functools

import numpy as np
import jax
import jax.numpy as jnp
from jax.experimental import pallas as pl
from jax.experimental.pallas import tpu as pltpu


_EPS = 1e-8
_NEG_INF = -1e9


def _round_up(x, m):
    return ((x + m - 1) // m) * m


def _fast_recip(x, scale=None):
    """EUP approximate reciprocal + one Newton step (~f32 accuracy).

    If `scale` is given it is folded into the Newton step so
    `_fast_recip(x, s) ~= s / x` without a separate full-size multiply.
    """
    r = pl.reciprocal(x, approx=True)
    r_s = r * scale if scale is not None else r
    return r_s * (2.0 - x * r)


# ----------------------------------------------------------------------------
# Pallas kernel: fused softmax + class cost (in-kernel one-hot matmul) + L1
# cdist + GIoU cost for a (Bb batch, TQ query) block.  Output is transposed
# (targets on sublanes, queries on lanes) so stores are lane-dense.
# ----------------------------------------------------------------------------
def _cost_kernel(logitsT_ref, pboxesT_ref, tboxes_ref, labels_ref, out_ref,
                 *, class_weight, bbox_weight, giou_weight):
    # logitsT_ref: [Bb, Cp, TQ]  native dtype, class-major; padded classes = -1e9
    # pboxesT_ref: [Bb, 4,  TQ]  f32 coordinate-major predicted boxes (cxcywh)
    # tboxes_ref : [Bb, Tp, 4 ]  f32 target boxes (cxcywh)
    # labels_ref : [Bb, Tp, 1 ]  int32 target labels
    # out_ref    : [Bb, Tp, TQ]  transposed cost block (lane-dense in Q)
    f32 = jnp.float32
    bb, tp = labels_ref.shape[0], labels_ref.shape[1]
    cp = logitsT_ref.shape[1]

    # ---- softmax over classes (sublane axis; padded classes vanish) ---------
    logits = logitsT_ref[...].astype(f32)                        # [Bb, Cp, TQ]
    m = jnp.max(logits, axis=1, keepdims=True)                   # [Bb, 1, TQ]
    e = jnp.exp(logits - m)                                      # [Bb, Cp, TQ]
    denom = jnp.sum(e, axis=1, keepdims=True)                    # [Bb, 1, TQ]
    probs = e * _fast_recip(denom)                               # [Bb, Cp, TQ]

    # ---- class cost: (-class_weight)-scaled one-hot contracted on the MXU ---
    labels = labels_ref[...]                                     # [Bb, Tp, 1]
    cls_iota = jax.lax.broadcasted_iota(jnp.int32, (bb, tp, cp), 2)
    onehot = jnp.where(cls_iota == labels,
                       jnp.float32(-class_weight), jnp.float32(0.0))
    cost_class_w = jnp.einsum('btc,bcq->btq', onehot, probs,
                              preferred_element_type=f32)        # [Bb, Tp, TQ]

    # ---- box costs: broadcast [Bb, Tp, 1] against [Bb, 1, TQ] ---------------
    pbT = pboxesT_ref[...].astype(f32)                           # [Bb, 4, TQ]
    tb = tboxes_ref[...].astype(f32)                             # [Bb, Tp, 4]
    p_cx, p_cy, p_w, p_h = (pbT[:, k:k + 1, :] for k in range(4))  # [Bb,1,TQ]
    t_cx, t_cy, t_w, t_h = (tb[:, :, k:k + 1] for k in range(4))   # [Bb,Tp,1]

    # L1 cdist with bbox_weight folded into the tiny coordinate broadcasts.
    bw = float(bbox_weight)
    if bw >= 0.0:
        cost_bbox_w = (jnp.abs(bw * p_cx - bw * t_cx)
                       + jnp.abs(bw * p_cy - bw * t_cy)
                       + jnp.abs(bw * p_w - bw * t_w)
                       + jnp.abs(bw * p_h - bw * t_h))
    else:  # unusual negative weight: keep exact semantics with one big mul
        cost_bbox_w = bw * (jnp.abs(p_cx - t_cx) + jnp.abs(p_cy - t_cy)
                            + jnp.abs(p_w - t_w) + jnp.abs(p_h - t_h))

    # cxcywh -> xyxy (all tiny [Bb,1,TQ] / [Bb,Tp,1] tensors)
    px1, py1 = p_cx - 0.5 * p_w, p_cy - 0.5 * p_h
    px2, py2 = p_cx + 0.5 * p_w, p_cy + 0.5 * p_h
    tx1, ty1 = t_cx - 0.5 * t_w, t_cy - 0.5 * t_h
    tx2, ty2 = t_cx + 0.5 * t_w, t_cy + 0.5 * t_h
    area_p = p_w * p_h                                           # [Bb, 1, TQ]
    area_t = t_w * t_h                                           # [Bb, Tp, 1]

    # generalized IoU (symmetric, so the transposed orientation is exact) with
    # a single fused reciprocal:
    #   giou = inter/union - (enclose-union)/enclose
    #        = (enclose*(inter-union) + union^2) / (union*enclose)
    inter_w = jnp.maximum(jnp.minimum(px2, tx2) - jnp.maximum(px1, tx1), 0.0)
    inter_h = jnp.maximum(jnp.minimum(py2, ty2) - jnp.maximum(py1, ty1), 0.0)
    inter = inter_w * inter_h                                    # [Bb, Tp, TQ]
    union = area_p + area_t - inter                              # [Bb, Tp, TQ]
    enc_w = jnp.maximum(px2, tx2) - jnp.minimum(px1, tx1)
    enc_h = jnp.maximum(py2, ty2) - jnp.minimum(py1, ty1)
    enclose = enc_w * enc_h                                      # [Bb, Tp, TQ]
    giou_num = enclose * (inter - union) + union * union
    giou_den = union * enclose + _EPS
    # -giou_weight folded into the reciprocal's Newton step.
    giou_term = giou_num * _fast_recip(giou_den,
                                       scale=jnp.float32(-giou_weight))

    out_ref[...] = (cost_class_w + cost_bbox_w + giou_term).astype(out_ref.dtype)


# ----------------------------------------------------------------------------
# Generation-aware tiling heuristics.
# ----------------------------------------------------------------------------
def _tpu_meta():
    vmem_bytes = 64 << 20
    try:
        info = pltpu.get_tpu_info()
        vmem_bytes = int(getattr(info, "vmem_capacity_bytes", vmem_bytes))
    except Exception:
        pass
    n_cores = 1
    try:
        kind = jax.devices()[0].device_kind.lower()
        if ("v4" in kind or "v7" in kind
                or ("v5" in kind and "lite" not in kind and "5e" not in kind)):
            n_cores = 2          # megacore / dual-TensorCore parts
    except Exception:
        pass
    return vmem_bytes, n_cores


def _choose_tq(qp):
    # query-tile: multiple of 128 that divides Qp, capped at 512.
    if qp <= 512:
        return qp
    for cand in (512, 384, 256):
        if qp % cand == 0:
            return cand
    return 128


def _choose_bb(batch, per_b_bytes, vmem_budget, n_cores, grid_q):
    fits = max(1, int(vmem_budget // max(per_b_bytes, 1)))
    bb = max(1, min(batch, fits))
    if n_cores > 1 and batch > 1:
        # Want an even number of grid steps and >= 2 steps per TensorCore so
        # both cores get work and each has pipeline depth to hide DMA.
        while bb > 1:
            steps = (-(-batch // bb)) * grid_q
            if steps % n_cores == 0 and steps >= 2 * n_cores:
                break
            bb -= 1
    return bb


def hungarian_cost_matrices(pred_logits, pred_boxes, tgt_labels, tgt_boxes,
                            class_weight=1.0, bbox_weight=1.0, giou_weight=1.0,
                            out_dtype=jnp.float32):
    """Returns the TRANSPOSED DETR matching cost matrix, computed in Pallas.

    Output shape is [Bp, Tp, Qp] (batch / target / query, each padded); the
    query axis is last and padded to a multiple of 128 so every store is an
    unmasked full-lane vst.  cost[b, t, q] equals the PyTorch module's C[q, t].
    """
    B, Q, C = pred_logits.shape
    T = tgt_boxes.shape[1]

    Qp = _round_up(Q, 128)              # lane-dense output last dim
    Tp = _round_up(max(T, 1), 8)        # sublane friendly, kept small (MXU idle)
    Cp = _round_up(C, 8)                # class axis is sublane axis (class-major)
    TQ = _choose_tq(Qp)
    grid_q = Qp // TQ

    vmem_bytes, n_cores = _tpu_meta()
    logit_bytes = jnp.dtype(pred_logits.dtype).itemsize
    out_bytes = jnp.dtype(out_dtype).itemsize
    # Per-batch-element VMEM footprint of one grid step: double-buffered I/O
    # blocks + full-size f32 temporaries.  Used to bound Bb.
    per_b = (12 * Tp * TQ * 4                 # [Tp, TQ] f32 temporaries
             + 3 * Cp * TQ * 4                # softmax temporaries
             + 2 * Cp * TQ * logit_bytes      # logits block, double-buffered
             + 2 * Tp * TQ * out_bytes        # output block, double-buffered
             + 2 * (4 * TQ + Tp * 4 + Tp) * 4)
    Bb = _choose_bb(B, per_b, vmem_bytes // 2, n_cores, grid_q)
    Bp = _round_up(B, Bb)
    grid = (Bp // Bb, grid_q)
    vmem_limit = int(min(int(vmem_bytes * 0.9),
                         max(32 << 20, 2 * Bb * per_b)))

    # Host-side layout plumbing only (logits stay in their native dtype until
    # the in-kernel softmax).  Padded classes get -1e9 so exp() kills them.
    logitsT = jnp.transpose(pred_logits, (0, 2, 1))               # [B, C, Q]
    logitsT = jnp.pad(logitsT, ((0, 0), (0, Cp - C), (0, 0)),
                      constant_values=_NEG_INF)
    logitsT = jnp.pad(logitsT, ((0, Bp - B), (0, 0), (0, Qp - Q)))
    pboxesT = jnp.pad(jnp.transpose(pred_boxes.astype(jnp.float32), (0, 2, 1)),
                      ((0, Bp - B), (0, 0), (0, Qp - Q)))         # [Bp, 4, Qp]
    tboxes = jnp.pad(tgt_boxes.astype(jnp.float32),
                     ((0, Bp - B), (0, Tp - T), (0, 0)))          # [Bp, Tp, 4]
    labels = jnp.pad(tgt_labels.astype(jnp.int32),
                     ((0, Bp - B), (0, Tp - T)))[:, :, None]      # [Bp, Tp, 1]

    kernel = functools.partial(_cost_kernel,
                               class_weight=float(class_weight),
                               bbox_weight=float(bbox_weight),
                               giou_weight=float(giou_weight))

    return pl.pallas_call(
        kernel,
        out_shape=jax.ShapeDtypeStruct((Bp, Tp, Qp), out_dtype),
        grid=grid,
        in_specs=[
            pl.BlockSpec((Bb, Cp, TQ), lambda b, q: (b, 0, q)),
            pl.BlockSpec((Bb, 4, TQ), lambda b, q: (b, 0, q)),
            pl.BlockSpec((Bb, Tp, 4), lambda b, q: (b, 0, 0)),
            pl.BlockSpec((Bb, Tp, 1), lambda b, q: (b, 0, 0)),
        ],
        out_specs=pl.BlockSpec((Bb, Tp, TQ), lambda b, q: (b, 0, q)),
        compiler_params=pltpu.CompilerParams(
            dimension_semantics=("parallel", "parallel"),
            vmem_limit_bytes=vmem_limit),
    )(logitsT, pboxesT, tboxes, labels)


# ----------------------------------------------------------------------------
# Host-side assignment (sequential Hungarian algorithm has no clean Pallas
# equivalent — it matches the PyTorch module's `.cpu()` + scipy call).
# ----------------------------------------------------------------------------
def _linear_sum_assignment(cost):
    try:
        from scipy.optimize import linear_sum_assignment
        return linear_sum_assignment(cost)
    except ImportError:
        # TODO(synk): exact Hungarian assignment unavailable without scipy; greedy fallback.
        c = np.array(cost, dtype=np.float64, copy=True)
        n = min(c.shape)
        rows, cols = [], []
        for _ in range(n):
            r, col = np.unravel_index(np.argmin(c), c.shape)
            rows.append(int(r)); cols.append(int(col))
            c[r, :] = np.inf; c[:, col] = np.inf
        order = np.argsort(rows)
        return np.asarray(rows)[order], np.asarray(cols)[order]


class HungarianMatcherPallas:
    def __init__(self, class_weight=1.0, bbox_weight=1.0, giou_weight=1.0):
        self.class_weight = class_weight
        self.bbox_weight = bbox_weight
        self.giou_weight = giou_weight

    def __call__(self, pred_logits, pred_boxes, targets):
        B, Q, C = pred_logits.shape
        t_max = max(1, max(int(t["labels"].shape[0]) for t in targets))

        labels_pad = np.zeros((B, t_max), dtype=np.int32)
        # pad boxes with a harmless valid box so the GIoU math stays benign
        boxes_pad = np.tile(np.array([0.5, 0.5, 0.2, 0.2], np.float32),
                            (B, t_max, 1))
        for i, t in enumerate(targets):
            ti = int(t["labels"].shape[0])
            if ti:
                labels_pad[i, :ti] = np.asarray(t["labels"])
                boxes_pad[i, :ti] = np.asarray(t["boxes"])

        cost_T = hungarian_cost_matrices(
            pred_logits, pred_boxes,
            jnp.asarray(labels_pad), jnp.asarray(boxes_pad),
            self.class_weight, self.bbox_weight, self.giou_weight)
        # Slice the padding off ON DEVICE so the D2H copy only moves real data.
        cost_host = np.asarray(jax.block_until_ready(cost_T[:B, :t_max, :Q]))

        indices = []
        for i, t in enumerate(targets):
            ti = int(t["labels"].shape[0])
            c_i = cost_host[i, :ti, :].T                # back to [Q, ti]
            ri, ci = _linear_sum_assignment(c_i)
            indices.append((np.asarray(ri, dtype=np.int64),
                            np.asarray(ci, dtype=np.int64)))
        return indices, cost_T


# ----------------------------------------------------------------------------
# Pure-numpy reference of the cost matrix (mirrors the PyTorch math).
# ----------------------------------------------------------------------------
def _ref_cost(logits, pboxes, labels, boxes, cw, bw, gw):
    logits = np.asarray(logits, np.float64)
    e = np.exp(logits - logits.max(-1, keepdims=True))
    probs = e / e.sum(-1, keepdims=True)
    cost_class = -probs[:, labels]

    pb = np.asarray(pboxes, np.float64)
    tb = np.asarray(boxes, np.float64)
    cost_bbox = np.abs(pb[:, None, :] - tb[None, :, :]).sum(-1)

    def to_xyxy(b):
        cx, cy, w, h = b[..., 0], b[..., 1], b[..., 2], b[..., 3]
        return np.stack([cx - 0.5 * w, cy - 0.5 * h,
                         cx + 0.5 * w, cy + 0.5 * h], axis=-1)

    b1, b2 = to_xyxy(pb), to_xyxy(tb)
    inter = np.clip(np.minimum(b1[:, None, 2:], b2[:, 2:]) -
                    np.maximum(b1[:, None, :2], b2[:, :2]), 0, None)
    inter = inter[..., 0] * inter[..., 1]
    area1 = (b1[:, 2] - b1[:, 0]) * (b1[:, 3] - b1[:, 1])
    area2 = (b2[:, 2] - b2[:, 0]) * (b2[:, 3] - b2[:, 1])
    union = area1[:, None] + area2 - inter
    iou = inter / union
    enc = ((np.maximum(b1[:, None, 2], b2[:, 2]) - np.minimum(b1[:, None, 0], b2[:, 0])) *
           (np.maximum(b1[:, None, 3], b2[:, 3]) - np.minimum(b1[:, None, 1], b2[:, 1])))
    giou = iou - (enc - union) / enc
    return cw * cost_class + bw * cost_bbox + gw * (-giou)


if __name__ == "__main__":
    B, Q, C = 2, 16, 32          # batch, num_queries, num_classes
    num_targets = [5, 8]

    key = jax.random.PRNGKey(0)
    k1, k2, k3, k4 = jax.random.split(key, 4)

    pred_logits = jax.random.normal(k1, (B, Q, C), dtype=jnp.float32)
    pred_cxcy = jax.random.uniform(k2, (B, Q, 2), minval=0.3, maxval=0.7)
    pred_wh = jax.random.uniform(k2, (B, Q, 2), minval=0.1, maxval=0.3)
    pred_boxes = jnp.concatenate([pred_cxcy, pred_wh], axis=-1)

    targets = []
    lkeys = jax.random.split(k3, B)
    bkeys = jax.random.split(k4, B)
    for i in range(B):
        ti = num_targets[i]
        labels = np.asarray(jax.random.randint(lkeys[i], (ti,), 0, C), np.int32)
        cxcy = jax.random.uniform(bkeys[i], (ti, 2), minval=0.3, maxval=0.7)
        wh = jax.random.uniform(bkeys[i], (ti, 2), minval=0.1, maxval=0.3)
        boxes = np.asarray(jnp.concatenate([cxcy, wh], axis=-1), np.float32)
        targets.append({"labels": labels, "boxes": boxes})

    matcher = HungarianMatcherPallas(class_weight=1.0, bbox_weight=1.0,
                                     giou_weight=1.0)
    indices, cost_T = matcher(pred_logits, pred_boxes, targets)
    cost_T = jax.block_until_ready(cost_T)

    # verify the Pallas (transposed) cost matrix against the numpy reference
    cost_np = np.asarray(cost_T)
    for i in range(B):
        ti = num_targets[i]
        ref = _ref_cost(np.asarray(pred_logits[i]), np.asarray(pred_boxes[i]),
                        targets[i]["labels"], targets[i]["boxes"],
                        1.0, 1.0, 1.0)
        np.testing.assert_allclose(cost_np[i, :ti, :Q].T, ref,
                                   rtol=3e-4, atol=1e-4)

    print("KERNEL_OK")
</pallas_src>

<mosaic_0001>
module attributes {stable_mosaic.version = 11 : i64} {
  func.func @_cost_kernel(%arg0: i32, %arg1: i32, %arg2: memref<2x32x128xf32, #tpu.memory_space<vmem>>, %arg3: memref<2x4x128xf32, #tpu.memory_space<vmem>>, %arg4: memref<2x8x4xf32, #tpu.memory_space<vmem>>, %arg5: memref<2x8x1xi32, #tpu.memory_space<vmem>>, %arg6: memref<2x8x128xf32, #tpu.memory_space<vmem>>) attributes {dimension_semantics = [#tpu.dimension_semantics<parallel>, #tpu.dimension_semantics<parallel>], iteration_bounds = array<i64: 1, 1>, scalar_prefetch = 0 : i64, scratch_operands = 0 : i64, tpu.core_type = #tpu.core_type<tc>, window_params = [{transform_indices = @transform_0, window_bounds = array<i64: 2, 32, 128>}, {transform_indices = @transform_1, window_bounds = array<i64: 2, 4, 128>}, {transform_indices = @transform_2, window_bounds = array<i64: 2, 8, 4>}, {transform_indices = @transform_3, window_bounds = array<i64: 2, 8, 1>}, {transform_indices = @transform_4, window_bounds = array<i64: 2, 8, 128>}]} {
    %c0 = arith.constant 0 : index
    %c0_0 = arith.constant 0 : index
    %c0_1 = arith.constant 0 : index
    %0 = vector.load %arg2[%c0, %c0_0, %c0_1] : memref<2x32x128xf32, #tpu.memory_space<vmem>>, vector<2x32x128xf32>
    %cst = arith.constant dense<0xFF800000> : vector<2x128xf32>
    %1 = vector.multi_reduction <maximumf>, %0, %cst [1] : vector<2x32x128xf32> to vector<2x128xf32>
    %2 = vector.shape_cast %1 : vector<2x128xf32> to vector<2x1x128xf32>
    %3 = vector.broadcast %2 : vector<2x1x128xf32> to vector<2x32x128xf32>
    %4 = arith.subf %0, %3 : vector<2x32x128xf32>
    %5 = math.exp %4 : vector<2x32x128xf32>
    %cst_2 = arith.constant dense<0.000000e+00> : vector<2x128xf32>
    %6 = vector.multi_reduction <add>, %5, %cst_2 [1] : vector<2x32x128xf32> to vector<2x128xf32>
    %7 = vector.shape_cast %6 : vector<2x128xf32> to vector<2x1x128xf32>
    %8 = tpu.reciprocal %7 {approx = true} : vector<2x1x128xf32> -> vector<2x1x128xf32>
    %9 = arith.mulf %7, %8 : vector<2x1x128xf32>
    %cst_3 = arith.constant 2.000000e+00 : f32
    %10 = vector.broadcast %cst_3 : f32 to vector<2x1x128xf32>
    %11 = arith.subf %10, %9 : vector<2x1x128xf32>
    %12 = arith.mulf %8, %11 : vector<2x1x128xf32>
    %13 = vector.broadcast %12 : vector<2x1x128xf32> to vector<2x32x128xf32>
    %14 = arith.mulf %5, %13 : vector<2x32x128xf32>
    %c0_4 = arith.constant 0 : index
    %c0_5 = arith.constant 0 : index
    %c0_6 = arith.constant 0 : index
    %15 = vector.load %arg5[%c0_4, %c0_5, %c0_6] : memref<2x8x1xi32, #tpu.memory_space<vmem>>, vector<2x8x1xi32>
    %16 = tpu.iota {dimensions = array<i32: 2>} : vector<2x8x32xi32>
    %17 = vector.broadcast %15 : vector<2x8x1xi32> to vector<2x8x32xi32>
    %18 = arith.cmpi eq, %16, %17 : vector<2x8x32xi32>
    %cst_7 = arith.constant -1.000000e+00 : f32
    %cst_8 = arith.constant 0.000000e+00 : f32
    %19 = vector.broadcast %cst_7 : f32 to vector<2x8x32xf32>
    %20 = vector.broadcast %cst_8 : f32 to vector<2x8x32xf32>
    %21 = arith.select %18, %19, %20 : vector<2x8x32xi1>, vector<2x8x32xf32>
    "tpu.trace_start"() <{level = 10 : i32, message = "btc,bcq->btq"}> : () -> ()
    %cst_9 = arith.constant dense<0.000000e+00> : vector<2x8x128xf32>
    %22 = tpu.matmul %21, %14, %cst_9 {dimension_numbers = #tpu.dot_dimension_numbers<[2], [1], [1], [2], [0, 0, 0, 1, 1, 2], [0], [0]>} : vector<2x8x32xf32>, vector<2x32x128xf32>, vector<2x8x128xf32> -> vector<2x8x128xf32>
    "tpu.trace_stop"() : () -> ()
    %c0_10 = arith.constant 0 : index
    %c0_11 = arith.constant 0 : index
    %c0_12 = arith.constant 0 : index
    %23 = vector.load %arg3[%c0_10, %c0_11, %c0_12] : memref<2x4x128xf32, #tpu.memory_space<vmem>>, vector<2x4x128xf32>
    %c0_13 = arith.constant 0 : index
    %c0_14 = arith.constant 0 : index
    %c0_15 = arith.constant 0 : index
    %24 = vector.load %arg4[%c0_13, %c0_14, %c0_15] : memref<2x8x4xf32, #tpu.memory_space<vmem>>, vector<2x8x4xf32>
    %25 = vector.extract_strided_slice %23 {offsets = [0, 0, 0], sizes = [2, 1, 128], strides = [1, 1, 1]} : vector<2x4x128xf32> to vector<2x1x128xf32>
    %26 = vector.extract_strided_slice %23 {offsets = [0, 1, 0], sizes = [2, 1, 128], strides = [1, 1, 1]} : vector<2x4x128xf32> to vector<2x1x128xf32>
    %27 = vector.extract_strided_slice %23 {offsets = [0, 2, 0], sizes = [2, 1, 128], strides = [1, 1, 1]} : vector<2x4x128xf32> to vector<2x1x128xf32>
    %28 = vector.extract_strided_slice %23 {offsets = [0, 3, 0], sizes = [2, 1, 128], strides = [1, 1, 1]} : vector<2x4x128xf32> to vector<2x1x128xf32>
    %29 = vector.extract_strided_slice %24 {offsets = [0, 0, 0], sizes = [2, 8, 1], strides = [1, 1, 1]} : vector<2x8x4xf32> to vector<2x8x1xf32>
    %30 = vector.extract_strided_slice %24 {offsets = [0, 0, 1], sizes = [2, 8, 1], strides = [1, 1, 1]} : vector<2x8x4xf32> to vector<2x8x1xf32>
    %31 = vector.extract_strided_slice %24 {offsets = [0, 0, 2], sizes = [2, 8, 1], strides = [1, 1, 1]} : vector<2x8x4xf32> to vector<2x8x1xf32>
    %32 = vector.extract_strided_slice %24 {offsets = [0, 0, 3], sizes = [2, 8, 1], strides = [1, 1, 1]} : vector<2x8x4xf32> to vector<2x8x1xf32>
    %cst_16 = arith.constant 1.000000e+00 : f32
    %33 = vector.broadcast %cst_16 : f32 to vector<2x1x128xf32>
    %34 = arith.mulf %33, %25 : vector<2x1x128xf32>
    %cst_17 = arith.constant 1.000000e+00 : f32
    %35 = vector.broadcast %cst_17 : f32 to vector<2x8x1xf32>
    %36 = arith.mulf %35, %29 : vector<2x8x1xf32>
    %37 = vector.broadcast %34 : vector<2x1x128xf32> to vector<2x8x128xf32>
    %38 = vector.broadcast %36 : vector<2x8x1xf32> to vector<2x8x128xf32>
    %39 = arith.subf %37, %38 : vector<2x8x128xf32>
    %40 = math.absf %39 : vector<2x8x128xf32>
    %cst_18 = arith.constant 1.000000e+00 : f32
    %41 = vector.broadcast %cst_18 : f32 to vector<2x1x128xf32>
    %42 = arith.mulf %41, %26 : vector<2x1x128xf32>
    %cst_19 = arith.constant 1.000000e+00 : f32
    %43 = vector.broadcast %cst_19 : f32 to vector<2x8x1xf32>
    %44 = arith.mulf %43, %30 : vector<2x8x1xf32>
    %45 = vector.broadcast %42 : vector<2x1x128xf32> to vector<2x8x128xf32>
    %46 = vector.broadcast %44 : vector<2x8x1xf32> to vector<2x8x128xf32>
    %47 = arith.subf %45, %46 : vector<2x8x128xf32>
    %48 = math.absf %47 : vector<2x8x128xf32>
    %49 = arith.addf %40, %48 : vector<2x8x128xf32>
    %cst_20 = arith.constant 1.000000e+00 : f32
    %50 = vector.broadcast %cst_20 : f32 to vector<2x1x128xf32>
    %51 = arith.mulf %50, %27 : vector<2x1x128xf32>
    %cst_21 = arith.constant 1.000000e+00 : f32
    %52 = vector.broadcast %cst_21 : f32 to vector<2x8x1xf32>
    %53 = arith.mulf %52, %31 : vector<2x8x1xf32>
    %54 = vector.broadcast %51 : vector<2x1x128xf32> to vector<2x8x128xf32>
    %55 = vector.broadcast %53 : vector<2x8x1xf32> to vector<2x8x128xf32>
    %56 = arith.subf %54, %55 : vector<2x8x128xf32>
    %57 = math.absf %56 : vector<2x8x128xf32>
    %58 = arith.addf %49, %57 : vector<2x8x128xf32>
    %cst_22 = arith.constant 1.000000e+00 : f32
    %59 = vector.broadcast %cst_22 : f32 to vector<2x1x128xf32>
    %60 = arith.mulf %59, %28 : vector<2x1x128xf32>
    %cst_23 = arith.constant 1.000000e+00 : f32
    %61 = vector.broadcast %cst_23 : f32 to vector<2x8x1xf32>
    %62 = arith.mulf %61, %32 : vector<2x8x1xf32>
    %63 = vector.broadcast %60 : vector<2x1x128xf32> to vector<2x8x128xf32>
    %64 = vector.broadcast %62 : vector<2x8x1xf32> to vector<2x8x128xf32>
    %65 = arith.subf %63, %64 : vector<2x8x128xf32>
    %66 = math.absf %65 : vector<2x8x128xf32>
    %67 = arith.addf %58, %66 : vector<2x8x128xf32>
    %cst_24 = arith.constant 5.000000e-01 : f32
    %68 = vector.broadcast %cst_24 : f32 to vector<2x1x128xf32>
    %69 = arith.mulf %68, %27 : vector<2x1x128xf32>
    %70 = arith.subf %25, %69 : vector<2x1x128xf32>
    %cst_25 = arith.constant 5.000000e-01 : f32
    %71 = vector.broadcast %cst_25 : f32 to vector<2x1x128xf32>
    %72 = arith.mulf %71, %28 : vector<2x1x128xf32>
    %73 = arith.subf %26, %72 : vector<2x1x128xf32>
    %cst_26 = arith.constant 5.000000e-01 : f32
    %74 = vector.broadcast %cst_26 : f32 to vector<2x1x128xf32>
    %75 = arith.mulf %74, %27 : vector<2x1x128xf32>
    %76 = arith.addf %25, %75 : vector<2x1x128xf32>
    %cst_27 = arith.constant 5.000000e-01 : f32
    %77 = vector.broadcast %cst_27 : f32 to vector<2x1x128xf32>
    %78 = arith.mulf %77, %28 : vector<2x1x128xf32>
    %79 = arith.addf %26, %78 : vector<2x1x128xf32>
    %cst_28 = arith.constant 5.000000e-01 : f32
    %80 = vector.broadcast %cst_28 : f32 to vector<2x8x1xf32>
    %81 = arith.mulf %80, %31 : vector<2x8x1xf32>
    %82 = arith.subf %29, %81 : vector<2x8x1xf32>
    %cst_29 = arith.constant 5.000000e-01 : f32
    %83 = vector.broadcast %cst_29 : f32 to vector<2x8x1xf32>
    %84 = arith.mulf %83, %32 : vector<2x8x1xf32>
    %85 = arith.subf %30, %84 : vector<2x8x1xf32>
    %cst_30 = arith.constant 5.000000e-01 : f32
    %86 = vector.broadcast %cst_30 : f32 to vector<2x8x1xf32>
    %87 = arith.mulf %86, %31 : vector<2x8x1xf32>
    %88 = arith.addf %29, %87 : vector<2x8x1xf32>
    %cst_31 = arith.constant 5.000000e-01 : f32
    %89 = vector.broadcast %cst_31 : f32 to vector<2x8x1xf32>
    %90 = arith.mulf %89, %32 : vector<2x8x1xf32>
    %91 = arith.addf %30, %90 : vector<2x8x1xf32>
    %92 = arith.mulf %27, %28 : vector<2x1x128xf32>
    %93 = arith.mulf %31, %32 : vector<2x8x1xf32>
    %94 = vector.broadcast %76 : vector<2x1x128xf32> to vector<2x8x128xf32>
    %95 = vector.broadcast %88 : vector<2x8x1xf32> to vector<2x8x128xf32>
    %96 = arith.minimumf %94, %95 : vector<2x8x128xf32>
    %97 = vector.broadcast %70 : vector<2x1x128xf32> to vector<2x8x128xf32>
    %98 = vector.broadcast %82 : vector<2x8x1xf32> to vector<2x8x128xf32>
    %99 = arith.maximumf %97, %98 : vector<2x8x128xf32>
    %100 = arith.subf %96, %99 : vector<2x8x128xf32>
    %cst_32 = arith.constant 0.000000e+00 : f32
    %101 = vector.broadcast %cst_32 : f32 to vector<2x8x128xf32>
    %102 = arith.maximumf %100, %101 : vector<2x8x128xf32>
    %103 = vector.broadcast %79 : vector<2x1x128xf32> to vector<2x8x128xf32>
    %104 = vector.broadcast %91 : vector<2x8x1xf32> to vector<2x8x128xf32>
    %105 = arith.minimumf %103, %104 : vector<2x8x128xf32>
    %106 = vector.broadcast %73 : vector<2x1x128xf32> to vector<2x8x128xf32>
    %107 = vector.broadcast %85 : vector<2x8x1xf32> to vector<2x8x128xf32>
    %108 = arith.maximumf %106, %107 : vector<2x8x128xf32>
    %109 = arith.subf %105, %108 : vector<2x8x128xf32>
    %cst_33 = arith.constant 0.000000e+00 : f32
    %110 = vector.broadcast %cst_33 : f32 to vector<2x8x128xf32>
    %111 = arith.maximumf %109, %110 : vector<2x8x128xf32>
    %112 = arith.mulf %102, %111 : vector<2x8x128xf32>
    %113 = vector.broadcast %92 : vector<2x1x128xf32> to vector<2x8x128xf32>
    %114 = vector.broadcast %93 : vector<2x8x1xf32> to vector<2x8x128xf32>
    %115 = arith.addf %113, %114 : vector<2x8x128xf32>
    %116 = arith.subf %115, %112 : vector<2x8x128xf32>
    %117 = vector.broadcast %76 : vector<2x1x128xf32> to vector<2x8x128xf32>
    %118 = vector.broadcast %88 : vector<2x8x1xf32> to vector<2x8x128xf32>
    %119 = arith.maximumf %117, %118 : vector<2x8x128xf32>
    %120 = vector.broadcast %70 : vector<2x1x128xf32> to vector<2x8x128xf32>
    %121 = vector.broadcast %82 : vector<2x8x1xf32> to vector<2x8x128xf32>
    %122 = arith.minimumf %120, %121 : vector<2x8x128xf32>
    %123 = arith.subf %119, %122 : vector<2x8x128xf32>
    %124 = vector.broadcast %79 : vector<2x1x128xf32> to vector<2x8x128xf32>
    %125 = vector.broadcast %91 : vector<2x8x1xf32> to vector<2x8x128xf32>
    %126 = arith.maximumf %124, %125 : vector<2x8x128xf32>
    %127 = vector.broadcast %73 : vector<2x1x128xf32> to vector<2x8x128xf32>
    %128 = vector.broadcast %85 : vector<2x8x1xf32> to vector<2x8x128xf32>
    %129 = arith.minimumf %127, %128 : vector<2x8x128xf32>
    %130 = arith.subf %126, %129 : vector<2x8x128xf32>
    %131 = arith.mulf %123, %130 : vector<2x8x128xf32>
    %132 = arith.subf %112, %116 : vector<2x8x128xf32>
    %133 = arith.mulf %131, %132 : vector<2x8x128xf32>
    %134 = arith.mulf %116, %116 : vector<2x8x128xf32>
    %135 = arith.addf %133, %134 : vector<2x8x128xf32>
    %136 = arith.mulf %116, %131 : vector<2x8x128xf32>
    %cst_34 = arith.constant 9.99999993E-9 : f32
    %137 = vector.broadcast %cst_34 : f32 to vector<2x8x128xf32>
    %138 = arith.addf %136, %137 : vector<2x8x128xf32>
    %139 = tpu.reciprocal %138 {approx = true} : vector<2x8x128xf32> -> vector<2x8x128xf32>
    %cst_35 = arith.constant -1.000000e+00 : f32
    %140 = vector.broadcast %cst_35 : f32 to vector<2x8x128xf32>
    %141 = arith.mulf %139, %140 : vector<2x8x128xf32>
    %142 = arith.mulf %138, %139 : vector<2x8x128xf32>
    %cst_36 = arith.constant 2.000000e+00 : f32
    %143 = vector.broadcast %cst_36 : f32 to vector<2x8x128xf32>
    %144 = arith.subf %143, %142 : vector<2x8x128xf32>
    %145 = arith.mulf %141, %144 : vector<2x8x128xf32>
    %146 = arith.mulf %135, %145 : vector<2x8x128xf32>
    %147 = arith.addf %22, %67 : vector<2x8x128xf32>
    %148 = arith.addf %147, %146 : vector<2x8x128xf32>
    %c0_37 = arith.constant 0 : index
    %c0_38 = arith.constant 0 : index
    %c0_39 = arith.constant 0 : index
    %149 = vector.load %arg6[%c0_37, %c0_38, %c0_39] : memref<2x8x128xf32, #tpu.memory_space<vmem>>, vector<2x8x128xf32>
    tpu.vector_store %arg6[%c0_37, %c0_38, %c0_39], %148 {strides = array<i32>} : memref<2x8x128xf32, #tpu.memory_space<vmem>>, vector<2x8x128xf32>,
    return
  }
  func.func @transform_0(%arg0: i32, %arg1: i32) -> (i32, i32, i32) {
    %c0_i32 = arith.constant 0 : i32
    %c0_i32_0 = arith.constant 0 : i32
    return %arg0, %c0_i32, %arg1 : i32, i32, i32
  }
  func.func @transform_1(%arg0: i32, %arg1: i32) -> (i32, i32, i32) {
    %c0_i32 = arith.constant 0 : i32
    %c0_i32_0 = arith.constant 0 : i32
    return %arg0, %c0_i32, %arg1 : i32, i32, i32
  }
  func.func @transform_2(%arg0: i32, %arg1: i32) -> (i32, i32, i32) {
    %c0_i32 = arith.constant 0 : i32
    %c0_i32_0 = arith.constant 0 : i32
    %c0_i32_1 = arith.constant 0 : i32
    return %arg0, %c0_i32, %c0_i32_0 : i32, i32, i32
  }
  func.func @transform_3(%arg0: i32, %arg1: i32) -> (i32, i32, i32) {
    %c0_i32 = arith.constant 0 : i32
    %c0_i32_0 = arith.constant 0 : i32
    %c0_i32_1 = arith.constant 0 : i32
    return %arg0, %c0_i32, %c0_i32_0 : i32, i32, i32
  }
  func.func @transform_4(%arg0: i32, %arg1: i32) -> (i32, i32, i32) {
    %c0_i32 = arith.constant 0 : i32
    %c0_i32_0 = arith.constant 0 : i32
    return %arg0, %c0_i32, %arg1 : i32, i32, i32
  }
}

</mosaic_0001>

<llo_original>
// kernel: tpu_custom_call.1
$region0: #{tpu_custom_call.1}
  #allocation0 [shape = 'u32[]', space=smem, size = 0x4, offset = 0x4, fixed_abs, tag = 'smem constant byte address 0x4 - core index']
  #allocation1 [shape = 'u32[72,128]{1,0:T(1,128)}', space=vmem, size = 0x9000, scoped, tag = 'internal scratch']
  %s0 = inlined_call_operand.hbm [shape: f32[2,32,128], index: 0, kind: input, shape index: {}]
  %s1 = inlined_call_operand.vmem [shape: f32[2,4,128], index: 1, kind: input, shape index: {}]
  %s2 = inlined_call_operand.vmem [shape: f32[2,8,4], index: 2, kind: input, shape index: {}]
  %s3 = inlined_call_operand.vmem [shape: s32[2,8,1], index: 3, kind: input, shape index: {}]
  %s4 = inlined_call_operand.hbm [shape: f32[2,8,128], index: 4, kind: output, shape index: {}]
  %s5 = sld [smem:[#allocation0]]
  $region30: #{tpu_custom_call.1} parent=0
    _
  %s7 = ssub.s32 1, %s5
  %s8 = scalar_select 0, %s7, %s5
  $region1: #{tpu_custom_call.1} parent=0
    #allocation2 [shape = 'u8[32768]{0}', space=vmem, size = 0x8000, scoped, tag = 'input window, operand 0, single buffered']
    #allocation3 [shape = 's32[1]{0}', space=sflag, size = 0x4, scoped, tag = 'scoped memory for tpu_custom_call.1']
    #allocation4 [shape = 's32[1]{0}', space=sflag, size = 0x4, scoped, tag = 'scoped memory for tpu_custom_call.1']
    #allocation5 [shape = 'u8[8192]{0}', space=vmem, size = 0x2000, scoped, tag = 'output window, operand 0, single buffered']
    %9 = vsyncpa [#allocation3], 0
    %10 = vsyncpa [#allocation4], 0
    // Predicated region
    $region2: #{tpu_custom_call.1} parent=1 // pred_check
      _
    $region3: #{tpu_custom_call.1} parent=1 // pred_check_branch
      %12 = sbr.rel (0) target = $region5
    $region4: #{tpu_custom_call.1} parent=1 // pred_region
      %14 = vsyncadd [#allocation3], 0
      %s15 = sshll.u32 %s0, 4
      %s16 = int_to_ptr.hbm [resolvable:$true] %s15
      %s17 = sshll.u32 [#allocation2], 4
      %s18 = int_to_ptr.vmem [resolvable:$true] %s17
      %23 = dma.hbm_to_vmem [thread:$0]  %s16, 1024, %s18, [#allocation3], 128, 128, 8
    $region5: #{tpu_custom_call.1} parent=1 // pred_fallthru
      _
    // Predicated region
    $region6: #{tpu_custom_call.1} parent=1 // pred_check
      _
    $region7: #{tpu_custom_call.1} parent=1 // pred_check_branch
      %25 = sbr.rel (0) target = $region9
    $region8: #{tpu_custom_call.1} parent=1 // pred_region
      _
    $region9: #{tpu_custom_call.1} parent=1 // pred_fallthru
      _
    // Predicated region
    $region10: #{tpu_custom_call.1} parent=1 // pred_check
      _
    $region11: #{tpu_custom_call.1} parent=1 // pred_check_branch
      %27 = sbr.rel (0) target = $region13
    $region12: #{tpu_custom_call.1} parent=1 // pred_region
      _
    $region13: #{tpu_custom_call.1} parent=1 // pred_fallthru
      _
    // Predicated region
    $region14: #{tpu_custom_call.1} parent=1 // pred_check
      _
    $region15: #{tpu_custom_call.1} parent=1 // pred_check_branch
      %29 = sbr.rel (0) target = $region17
    $region16: #{tpu_custom_call.1} parent=1 // pred_region
      _
    $region17: #{tpu_custom_call.1} parent=1 // pred_fallthru
      _
    // Predicated region
    $region18: #{tpu_custom_call.1} parent=1 // pred_check
      _
    $region19: #{tpu_custom_call.1} parent=1 // pred_check_branch
      %31 = sbr.rel (0) target = $region21
    $region20: #{tpu_custom_call.1} parent=1 // pred_region
      %33 = dma.done [#allocation3], 1024
    $region21: #{tpu_custom_call.1} parent=1 // pred_fallthru
      _
    %v34 = vld [vmem:[#allocation2] sm:$0xff]
    %v35 = vld [vmem:[#allocation2 + $0x8] sm:$0xff]
    %v36 = vld [vmem:[#allocation2 + $0x10] sm:$0xff]
    %v37 = vld [vmem:[#allocation2 + $0x18] sm:$0xff]
    %v38 = vld [vmem:[#allocation2 + $0x20] sm:$0xff]
    %v39 = vld [vmem:[#allocation2 + $0x28] sm:$0xff]
    %v40 = vld [vmem:[#allocation2 + $0x30] sm:$0xff]
    %v41 = vld [vmem:[#allocation2 + $0x38] sm:$0xff]
    %v42 = vmax.f32 %v34, %v36
    %v43 = vmax.f32 %v35, %v37
    %v44 = vmax.f32 %v42, %v43
    %v45 = vrot.slane %v44, 4
    %v46 = vmax.f32 %v44, %v45
    %v47 = vrot.slane %v46, 2
    %v48 = vmax.f32 %v46, %v47
    %v49 = vrot.slane %v48, 1
    %v50 = vmax.f32 %v48, %v49
    %v51 = vmax.f32 %v38, %v40
    %v52 = vmax.f32 %v39, %v41
    %v53 = vmax.f32 %v51, %v52
    %v54 = vrot.slane %v53, 4
    %v55 = vmax.f32 %v53, %v54
    %v56 = vrot.slane %v55, 2
    %v57 = vmax.f32 %v55, %v56
    %v58 = vrot.slane %v57, 1
    %v59 = vmax.f32 %v57, %v58
    %v60 = vsub.f32 %v34, %v50
    %v61 = vsub.f32 %v35, %v50
    %v62 = vsub.f32 %v36, %v50
    %v63 = vsub.f32 %v37, %v50
    %v64 = vsub.f32 %v38, %v59
    %v65 = vsub.f32 %v39, %v59
    %v66 = vsub.f32 %v40, %v59
    %v67 = vsub.f32 %v41, %v59
    %v68 = vmul.f32 %v60, 1.442695
    %v69 = vpow.pop %v68
    %v70 = vmul.f32 %v61, 1.442695
    %v71 = vpow.pop %v70
    %v72 = vmul.f32 %v62, 1.442695
    %v73 = vpow.pop %v72
    %v74 = vmul.f32 %v63, 1.442695
    %v75 = vpow.pop %v74
    %v76 = vmul.f32 %v64, 1.442695
    %v77 = vpow.pop %v76
    %v78 = vmul.f32 %v65, 1.442695
    %v79 = vpow.pop %v78
    %v80 = vmul.f32 %v66, 1.442695
    %v81 = vpow.pop %v80
    %v82 = vmul.f32 %v67, 1.442695
    %v83 = vpow.pop %v82
    %v84 = vadd.f32 %v69, %v71
    %v85 = vadd.f32 %v84, %v73
    %v86 = vadd.f32 %v85, %v75
    %v87 = vrot.slane %v86, 4
    %v88 = vadd.f32 %v86, %v87
    %v89 = vrot.slane %v88, 2
    %v90 = vadd.f32 %v88, %v89
    %v91 = vrot.slane %v90, 1
    %v92 = vadd.f32 %v90, %v91
    %v93 = vadd.f32 %v77, %v79
    %v94 = vadd.f32 %v93, %v81
    %v95 = vadd.f32 %v94, %v83
    %v96 = vrot.slane %v95, 4
    %v97 = vadd.f32 %v95, %v96
    %v98 = vrot.slane %v97, 2
    %v99 = vadd.f32 %v97, %v98
    %v100 = vrot.slane %v99, 1
    %v101 = vadd.f32 %v99, %v100
    %v102 = vrcp.pop %v92
    %v103 = vrcp.pop %v101
    %v104 = vmul.f32 %v92, %v102
    %v105 = vmul.f32 %v101, %v103
    %v106 = vsub.f32 2.0, %v104
    %v107 = vsub.f32 2.0, %v105
    %v108 = vmul.f32 %v102, %v106
    %v109 = vmul.f32 %v103, %v107
    %v110 = vmul.f32 %v69, %v108
    %v111 = vmul.f32 %v71, %v108
    %v112 = vmul.f32 %v73, %v108
    %v113 = vmul.f32 %v75, %v108
    %v114 = vmul.f32 %v77, %v109
    %v115 = vmul.f32 %v79, %v109
    %v116 = vmul.f32 %v81, %v109
    %v117 = vmul.f32 %v83, %v109
    %v118 = vld [vmem:[%s3] sm:$0xff]
    %v119 = vld [vmem:[%s3 + $0x8] sm:$0xff]
    %v120 = vlaneseq
    %v121 = vand.u32 %v120, 127
    %122 = vset.pattern.permute.xlu0 0
    %123 = vperm.xlu0 %122, %v118
    %v124 = vpop.permute.xlu0 %123
    %125 = vset.pattern.permute.xlu0 0
    %126 = vperm.xlu0 %125, %v119
    %v127 = vpop.permute.xlu0 %126
    %vm128 = vcmp.eq.s32.totalorder %v121, %v124
    %vm129 = vcmp.eq.s32.totalorder %v121, %v127
    %v130 = vsel %vm128, -1.0, 0.0
    %v131 = vsel %vm129, -1.0, 0.0
    %v132 = vld [vmem:[%s1] sm:$0xf]
    %v133 = vld [vmem:[%s1 + $0x4] sm:$0xf]
    %v134 = vld [vmem:[%s2] sm:$0xff]
    %v135 = vld [vmem:[%s2 + $0x8] sm:$0xff]
    %v136 = vperm.slane %v132, 0
    %v137 = vperm.slane %v133, 0
    %139 = vset.pattern.permute.xlu0 0
    %140 = vperm.xlu0 %139, %v134
    %v141 = vpop.permute.xlu0 %140
    %144 = vset.pattern.permute.xlu0 0
    %145 = vperm.xlu0 %144, %v135
    %v146 = vpop.permute.xlu0 %145
    %v148 = vsub.f32 %v136, %v141
    %v149 = vsub.f32 %v137, %v146
    %v150 = vand.u32 2147483647, %v148
    %v151 = vand.u32 2147483647, %v149
    %v152 = vperm.slane %v132, 1
    %v153 = vperm.slane %v133, 1
    %154 = vset.pattern.permute.xlu0 1
    %155 = vperm.xlu0 %154, %v134
    %v156 = vpop.permute.xlu0 %155
    %158 = vset.pattern.permute.xlu0 1
    %159 = vperm.xlu0 %158, %v135
    %v160 = vpop.permute.xlu0 %159
    %v162 = vsub.f32 %v152, %v156
    %v163 = vsub.f32 %v153, %v160
    %v164 = vand.u32 2147483647, %v162
    %v165 = vand.u32 2147483647, %v163
    %v166 = vadd.f32 %v150, %v164
    %v167 = vadd.f32 %v151, %v165
    %v168 = vperm.slane %v132, 2
    %v169 = vperm.slane %v133, 2
    %170 = vset.pattern.permute.xlu0 2
    %171 = vperm.xlu0 %170, %v134
    %v172 = vpop.permute.xlu0 %171
    %174 = vset.pattern.permute.xlu0 2
    %175 = vperm.xlu0 %174, %v135
    %v176 = vpop.permute.xlu0 %175
    %v178 = vsub.f32 %v168, %v172
    %v179 = vsub.f32 %v169, %v176
    %v180 = vand.u32 2147483647, %v178
    %v181 = vand.u32 2147483647, %v179
    %v182 = vadd.f32 %v166, %v180
    %v183 = vadd.f32 %v167, %v181
    %v184 = vperm.slane %v132, 3
    %v185 = vperm.slane %v133, 3
    %186 = vset.pattern.permute.xlu0 3
    %187 = vperm.xlu0 %186, %v134
    %v188 = vpop.permute.xlu0 %187
    %190 = vset.pattern.permute.xlu0 3
    %191 = vperm.xlu0 %190, %v135
    %v192 = vpop.permute.xlu0 %191
    %v194 = vsub.f32 %v184, %v188
    %v195 = vsub.f32 %v185, %v192
    %v196 = vand.u32 2147483647, %v194
    %v197 = vand.u32 2147483647, %v195
    %v198 = vadd.f32 %v182, %v196
    %v199 = vadd.f32 %v183, %v197
    %v200 = vmul.f32 %v132, 0.5
    %v201 = vmul.f32 %v133, 0.5
    %v204 = vrot.slane %v200, 2
    %v205 = vrot.slane %v201, 2
    %v208 = vsub.f32 %v132, %v204
    %v209 = vsub.f32 %v133, %v205
    %v210 = vadd.f32 %v132, %v204
    %v211 = vadd.f32 %v133, %v205
    %v212 = vmul.f32 %v134, 0.5
    %v213 = vmul.f32 %v135, 0.5
    %216 = vrot.lane.b32.xlu0 %v212, 126
    %v217 = vpop.permute.xlu0 %216
    %218 = vrot.lane.b32.xlu0 %v213, 126
    %v219 = vpop.permute.xlu0 %218
    %v222 = vsub.f32 %v134, %v217
    %v223 = vsub.f32 %v135, %v219
    %v224 = vadd.f32 %v134, %v217
    %v225 = vadd.f32 %v135, %v219
    %v228 = vrot.slane %v132, 1
    %v229 = vrot.slane %v133, 1
    %v232 = vmul.f32 %v132, %v228
    %v233 = vmul.f32 %v133, %v229
    %234 = vrot.lane.b32.xlu0 %v134, 127
    %v235 = vpop.permute.xlu0 %234
    %236 = vrot.lane.b32.xlu0 %v135, 127
    %v237 = vpop.permute.xlu0 %236
    %v240 = vmul.f32 %v134, %v235
    %v241 = vmul.f32 %v135, %v237
    %v242 = vperm.slane %v210, 0
    %v243 = vperm.slane %v211, 0
    %245 = vset.pattern.permute.xlu0 0
    %246 = vperm.xlu0 %245, %v224
    %v247 = vpop.permute.xlu0 %246
    %250 = vset.pattern.permute.xlu0 0
    %251 = vperm.xlu0 %250, %v225
    %v252 = vpop.permute.xlu0 %251
    %v254 = vmin.f32 %v242, %v247
    %v255 = vmin.f32 %v243, %v252
    %v256 = vperm.slane %v208, 0
    %v257 = vperm.slane %v209, 0
    %259 = vset.pattern.permute.xlu0 0
    %260 = vperm.xlu0 %259, %v222
    %v261 = vpop.permute.xlu0 %260
    %264 = vset.pattern.permute.xlu0 0
    %265 = vperm.xlu0 %264, %v223
    %v266 = vpop.permute.xlu0 %265
    %v268 = vmax.f32 %v256, %v261
    %v269 = vmax.f32 %v257, %v266
    %v270 = vsub.f32 %v254, %v268
    %v271 = vsub.f32 %v255, %v269
    %v272 = vmax.f32 %v270, 0.0
    %v273 = vmax.f32 %v271, 0.0
    %v274 = vperm.slane %v210, 1
    %v275 = vperm.slane %v211, 1
    %276 = vset.pattern.permute.xlu0 1
    %277 = vperm.xlu0 %276, %v224
    %v278 = vpop.permute.xlu0 %277
    %280 = vset.pattern.permute.xlu0 1
    %281 = vperm.xlu0 %280, %v225
    %v282 = vpop.permute.xlu0 %281
    %v284 = vmin.f32 %v274, %v278
    %v285 = vmin.f32 %v275, %v282
    %v286 = vperm.slane %v208, 1
    %v287 = vperm.slane %v209, 1
    %288 = vset.pattern.permute.xlu0 1
    %289 = vperm.xlu0 %288, %v222
    %v290 = vpop.permute.xlu0 %289
    %292 = vset.pattern.permute.xlu0 1
    %293 = vperm.xlu0 %292, %v223
    %v294 = vpop.permute.xlu0 %293
    %v296 = vmax.f32 %v286, %v290
    %v297 = vmax.f32 %v287, %v294
    %v298 = vsub.f32 %v284, %v296
    %v299 = vsub.f32 %v285, %v297
    %v300 = vmax.f32 %v298, 0.0
    %v301 = vmax.f32 %v299, 0.0
    %v302 = vmul.f32 %v272, %v300
    %v303 = vmul.f32 %v273, %v301
    %v304 = vperm.slane %v232, 2
    %v305 = vperm.slane %v233, 2
    %307 = vset.pattern.permute.xlu0 2
    %308 = vperm.xlu0 %307, %v240
    %v309 = vpop.permute.xlu0 %308
    %312 = vset.pattern.permute.xlu0 2
    %313 = vperm.xlu0 %312, %v241
    %v314 = vpop.permute.xlu0 %313
    %v316 = vadd.f32 %v304, %v309
    %v317 = vadd.f32 %v305, %v314
    %v318 = vsub.f32 %v316, %v302
    %v319 = vsub.f32 %v317, %v303
    %v320 = vmax.f32 %v242, %v247
    %v321 = vmax.f32 %v243, %v252
    %v322 = vmin.f32 %v256, %v261
    %v323 = vmin.f32 %v257, %v266
    %v324 = vsub.f32 %v320, %v322
    %v325 = vsub.f32 %v321, %v323
    %v326 = vmax.f32 %v274, %v278
    %v327 = vmax.f32 %v275, %v282
    %v328 = vmin.f32 %v286, %v290
    %v329 = vmin.f32 %v287, %v294
    %v330 = vsub.f32 %v326, %v328
    %v331 = vsub.f32 %v327, %v329
    %v332 = vmul.f32 %v324, %v330
    %v333 = vmul.f32 %v325, %v331
    %v334 = vsub.f32 %v302, %v318
    %v335 = vsub.f32 %v303, %v319
    %v336 = vmul.f32 %v332, %v334
    %v337 = vmul.f32 %v333, %v335
    %v338 = vmul.f32 %v318, %v318
    %v339 = vmul.f32 %v319, %v319
    %v340 = vadd.f32 %v336, %v338
    %v341 = vadd.f32 %v337, %v339
    %v342 = vmul.f32 %v318, %v332
    %v343 = vmul.f32 %v319, %v333
    %v344 = vadd.f32 %v342, 1e-08
    %v345 = vadd.f32 %v343, 1e-08
    %v346 = vrcp.pop %v344
    %v347 = vrcp.pop %v345
    %v348 = vmul.f32 %v346, -1.0
    %v349 = vmul.f32 %v347, -1.0
    %v350 = vmul.f32 %v344, %v346
    %v351 = vmul.f32 %v345, %v347
    %v352 = vsub.f32 2.0, %v350
    %v353 = vsub.f32 2.0, %v351
    %v354 = vmul.f32 %v348, %v352
    %v355 = vmul.f32 %v349, %v353
    %v356 = vmul.f32 %v340, %v354
    %v357 = vmul.f32 %v341, %v355
    %vm358 = vcmask 261120
    %v360 = vsel %vm358, %v130, 0
    %362 = vmatpush.msra.mxu0 0.0
    %363 = vmatpush.msra.mxu0 0.0
    %364 = vmatpush.msra.mxu0 0.0
    %365 = vmatpush.msra.mxu0 0.0
    %366 = vmatpush.msra.mxu0 0.0
    %367 = vmatpush.msra.mxu0 0.0
    %368 = vmatpush.msra.mxu0 0.0
    %369 = vmatpush.msra.mxu0 0.0
    %370 = vmatpush.msra.mxu0 0.0
    %371 = vmatpush.msra.mxu0 0.0
    %372 = vmatpush.msra.mxu0 0.0
    %373 = vmatpush.msra.mxu0 0.0
    %374 = vmatpush.msra.mxu0 %v113
    %375 = vmatpush.msra.mxu0 %v112
    %376 = vmatpush.msra.mxu0 %v111
    %377 = vmatpush.msra.mxu0 %v110
    %378 = vmatmul.f32.gmra.mxu0 %v360
    %v379 = vpop.f32.mrf.mxu0
    %v380 = vadd.f32 %v198, %v379
    %381 = vdwg.mxu0
    %v383 = vsel %vm358, %v131, 0
    %385 = vmatpush.msra.mxu0 0.0
    %386 = vmatpush.msra.mxu0 0.0
    %387 = vmatpush.msra.mxu0 0.0
    %388 = vmatpush.msra.mxu0 0.0
    %389 = vmatpush.msra.mxu0 0.0
    %390 = vmatpush.msra.mxu0 0.0
    %391 = vmatpush.msra.mxu0 0.0
    %392 = vmatpush.msra.mxu0 0.0
    %393 = vmatpush.msra.mxu0 0.0
    %394 = vmatpush.msra.mxu0 0.0
    %395 = vmatpush.msra.mxu0 0.0
    %396 = vmatpush.msra.mxu0 0.0
    %397 = vmatpush.msra.mxu0 %v117
    %398 = vmatpush.msra.mxu0 %v116
    %399 = vmatpush.msra.mxu0 %v115
    %400 = vmatpush.msra.mxu0 %v114
    %401 = vmatmul.f32.gmra.mxu0 %v383
    %v402 = vpop.f32.mrf.mxu0
    %v403 = vadd.f32 %v199, %v402
    %404 = vdwg.mxu0
    %v405 = vadd.f32 %v380, %v356
    %v406 = vadd.f32 %v403, %v357
    %407 = vst [vmem:[#allocation5] sm:$0xff] %v405
    %408 = vst [vmem:[#allocation5 + $0x8] sm:$0xff] %v406
    // Predicated region
    $region22: #{tpu_custom_call.1} parent=1 // pred_check
      _
    $region23: #{tpu_custom_call.1} parent=1 // pred_check_branch
      %410 = sbr.rel (0) target = $region25
    $region24: #{tpu_custom_call.1} parent=1 // pred_region
      %412 = vsyncadd [#allocation4], 0
      %s413 = sshll.u32 [#allocation5], 4
      %s414 = int_to_ptr.vmem [resolvable:$true] %s413
      %s415 = sshll.u32 %s4, 4
      %s416 = int_to_ptr.hbm [resolvable:$true] %s415
      %421 = dma.vmem_to_hbm [thread:$0]  %s414, 256, %s416, [#allocation4], 128, 128, 8
    $region25: #{tpu_custom_call.1} parent=1 // pred_fallthru
      _
    // Predicated region
    $region26: #{tpu_custom_call.1} parent=1 // pred_check
      _
    $region27: #{tpu_custom_call.1} parent=1 // pred_check_branch
      %423 = sbr.rel (0) target = $region29
    $region28: #{tpu_custom_call.1} parent=1 // pred_region
      %425 = dma.done [#allocation4], 256
    $region29: #{tpu_custom_call.1} parent=1 // pred_fallthru
      _
    %426 = vsyncpa [#allocation3], 1
    %427 = vsyncpa [#allocation4], 1

</llo_original>
